<compile_context>
chip_gen: v5e
topology: v5e:2x2
jax: 0.10.0
libtpu: 0.0.40
codegen_flags: <defaults>
</compile_context>

<pallas_src>
import math
import functools

import jax
import jax.numpy as jnp
from jax.experimental import pallas as pl
from jax.experimental.pallas import tpu as pltpu


def make_pe(max_len, d_model, dtype=jnp.float32):
    """Sinusoidal positional-encoding table; matches the torch __init__ math."""
    position = jnp.arange(max_len, dtype=jnp.float32)[:, None]               # [L, 1]
    div_term = jnp.exp(
        jnp.arange(0, d_model, 2, dtype=jnp.float32) * (-math.log(10000.0) / d_model)
    )                                                                        # [D/2]
    pe = jnp.zeros((max_len, d_model), dtype=jnp.float32)
    pe = pe.at[:, 0::2].set(jnp.sin(position * div_term))
    pe = pe.at[:, 1::2].set(jnp.cos(position * div_term))
    return pe.astype(dtype)


def _pe_add_kernel(x_ref, pe_ref, o_ref):
    # x_ref: (ts, tb, D); pe_ref: (ts, 1, D) -> broadcast over batch, f32 math.
    y = x_ref[...].astype(jnp.float32) + pe_ref[...].astype(jnp.float32)
    o_ref[...] = y.astype(o_ref.dtype)


def _pe_add_dropout_kernel(x_ref, pe_ref, bits_ref, o_ref, *, thresh, scale):
    # Same add, plus inverted dropout: single compare + select on loaded vregs.
    y = x_ref[...].astype(jnp.float32) + pe_ref[...].astype(jnp.float32)
    keep = bits_ref[...] >= jnp.uint32(thresh)           # P(keep) = 1 - p
    y = jnp.where(keep, y * jnp.float32(scale), jnp.float32(0.0))
    o_ref[...] = y.astype(o_ref.dtype)


def _choose_tiles(S, B, D, itemsize, budget_bytes=2 << 20):
    """Pick (block_s, block_b) so one x tile stays within ~budget_bytes of VMEM.

    ~2 MiB per x tile keeps (2x in + 2x out + bits + pe) well under the 32 MiB
    scoped default on all generations (v7x has only 64 MiB physical VMEM),
    while being large enough to sit near the HBM roofline.
    """
    block_b = B
    if B * D * itemsize > budget_bytes:                  # decode-like: huge B*D row
        block_b = max(1, budget_bytes // (D * itemsize))
        block_b = min(B, max(8, (block_b // 8) * 8))     # sublane-aligned tile
    block_s = max(1, budget_bytes // max(1, block_b * D * itemsize))
    block_s = min(block_s, S)
    if block_s >= 8:
        block_s = (block_s // 8) * 8                     # full 8-row sublane groups
    return int(block_s), int(block_b)


def positional_encoding(x, pe, *, p=0.1, train=False, rng=None):
    """x: [S, B, D]; pe: [max_len, D] with max_len >= S.  Returns [S, B, D]."""
    S, B, D = x.shape
    assert pe.shape[0] >= S and pe.shape[1] == D
    p = float(p)

    if train and p >= 1.0:                               # torch Dropout(p=1) -> zeros
        return jnp.zeros_like(x)

    block_s, block_b = _choose_tiles(S, B, D, x.dtype.itemsize)
    grid = (pl.cdiv(S, block_s), pl.cdiv(B, block_b))

    # pe stays [max_len, D] in HBM (no wrapper-side slice, no batch expansion);
    # view it as [max_len, 1, D] so the kernel receives a (block_s, 1, D) tile
    # whose last two block dims equal the full dims (layout-safe for any S).
    pe3 = pe.reshape(pe.shape[0], 1, D)

    x_spec = pl.BlockSpec((block_s, block_b, D), lambda i, j: (i, j, 0))
    pe_spec = pl.BlockSpec((block_s, 1, D), lambda i, j: (i, 0, 0))
    out_spec = pl.BlockSpec((block_s, block_b, D), lambda i, j: (i, j, 0))

    use_dropout = train and p > 0.0

    # VMEM budget: double-buffered x in + out (+ dropout bits) + pe tiles.
    tile_x = block_s * block_b * D * x.dtype.itemsize
    tile_pe = block_s * D * pe.dtype.itemsize
    need = 4 * tile_x + 2 * tile_pe
    if use_dropout:
        need += 2 * block_s * block_b * D * 4            # uint32 bits tile
    vmem_limit = int(min(32 * 1024 * 1024, max(2 * need, 8 * 1024 * 1024)))

    cparams = pltpu.CompilerParams(
        # Both grid axes are fully independent (no accumulator): "parallel"
        # lets Mosaic shard the grid across both TensorCores on v7x; neutral
        # on single-TC v5e/v6e.
        dimension_semantics=("parallel", "parallel"),
        vmem_limit_bytes=vmem_limit,
    )

    if use_dropout:
        # TODO(synk): switch the mask source to pltpu.prng_seed/prng_random_bits
        # (zero extra HBM traffic) once interpret-mode portability is not needed.
        if rng is None:
            rng = jax.random.PRNGKey(0)
        bits = jax.random.bits(rng, (S, B, D), dtype=jnp.uint32)
        thresh = min(int(round(p * 4294967296.0)), 4294967295)   # no wrap at p~1
        scale = 1.0 / (1.0 - p)
        kernel = functools.partial(_pe_add_dropout_kernel, thresh=thresh, scale=scale)
        in_specs = [x_spec, pe_spec, x_spec]
        args = (x, pe3, bits)
    else:
        kernel = _pe_add_kernel
        in_specs = [x_spec, pe_spec]
        args = (x, pe3)

    return pl.pallas_call(
        kernel,
        out_shape=jax.ShapeDtypeStruct((S, B, D), x.dtype),
        grid=grid,
        in_specs=in_specs,
        out_specs=out_spec,
        compiler_params=cparams,
    )(*args)


if __name__ == "__main__":
    # Small shapes consistent with forward(x: [seq_len, batch, d_model]).
    S, B, D = 8, 2, 32
    max_len = 64

    key = jax.random.PRNGKey(0)
    x = jax.random.normal(key, (S, B, D), dtype=jnp.float32)
    pe = make_pe(max_len, D)

    # Eval mode: dropout is identity -> exact numerical match expected.
    out = jax.block_until_ready(positional_encoding(x, pe, p=0.1, train=False))
    ref = x + pe[:S][:, None, :]
    assert out.shape == (S, B, D)
    assert jnp.allclose(out, ref, atol=1e-6, rtol=1e-6), "eval-mode mismatch"

    # Train mode: inverted dropout — every kept element equals ref / (1 - p).
    p = 0.1
    out_tr = jax.block_until_ready(
        positional_encoding(x, pe, p=p, train=True, rng=jax.random.PRNGKey(1234)))
    kept = out_tr != 0.0
    assert jnp.allclose(jnp.where(kept, out_tr, 0.0),
                        jnp.where(kept, ref / (1.0 - p), 0.0),
                        atol=1e-5, rtol=1e-5), "train-mode mismatch"

    print("KERNEL_OK")
</pallas_src>

<mosaic_0001>
module attributes {stable_mosaic.version = 11 : i64} {
  func.func @_pe_add_kernel(%arg0: i32, %arg1: i32, %arg2: memref<8x2x32xf32, #tpu.memory_space<vmem>>, %arg3: memref<8x1x32xf32, #tpu.memory_space<vmem>>, %arg4: memref<8x2x32xf32, #tpu.memory_space<vmem>>) attributes {dimension_semantics = [#tpu.dimension_semantics<parallel>, #tpu.dimension_semantics<parallel>], iteration_bounds = array<i64: 1, 1>, scalar_prefetch = 0 : i64, scratch_operands = 0 : i64, tpu.core_type = #tpu.core_type<tc>, window_params = [{transform_indices = @transform_0, window_bounds = array<i64: 8, 2, 32>}, {transform_indices = @transform_1, window_bounds = array<i64: 8, 1, 32>}, {transform_indices = @transform_2, window_bounds = array<i64: 8, 2, 32>}]} {
    %c0 = arith.constant 0 : index
    %c0_0 = arith.constant 0 : index
    %c0_1 = arith.constant 0 : index
    %0 = vector.load %arg2[%c0, %c0_0, %c0_1] : memref<8x2x32xf32, #tpu.memory_space<vmem>>, vector<8x2x32xf32>
    %c0_2 = arith.constant 0 : index
    %c0_3 = arith.constant 0 : index
    %c0_4 = arith.constant 0 : index
    %1 = vector.load %arg3[%c0_2, %c0_3, %c0_4] : memref<8x1x32xf32, #tpu.memory_space<vmem>>, vector<8x1x32xf32>
    %2 = vector.broadcast %1 : vector<8x1x32xf32> to vector<8x2x32xf32>
    %3 = arith.addf %0, %2 : vector<8x2x32xf32>
    %c0_5 = arith.constant 0 : index
    %c0_6 = arith.constant 0 : index
    %c0_7 = arith.constant 0 : index
    %4 = vector.load %arg4[%c0_5, %c0_6, %c0_7] : memref<8x2x32xf32, #tpu.memory_space<vmem>>, vector<8x2x32xf32>
    tpu.vector_store %arg4[%c0_5, %c0_6, %c0_7], %3 {strides = array<i32>} : memref<8x2x32xf32, #tpu.memory_space<vmem>>, vector<8x2x32xf32>,
    return
  }
  func.func @transform_0(%arg0: i32, %arg1: i32) -> (i32, i32, i32) {
    %c0_i32 = arith.constant 0 : i32
    %c0_i32_0 = arith.constant 0 : i32
    return %arg0, %arg1, %c0_i32 : i32, i32, i32
  }
  func.func @transform_1(%arg0: i32, %arg1: i32) -> (i32, i32, i32) {
    %c0_i32 = arith.constant 0 : i32
    %c0_i32_0 = arith.constant 0 : i32
    %c0_i32_1 = arith.constant 0 : i32
    return %arg0, %c0_i32, %c0_i32_0 : i32, i32, i32
  }
  func.func @transform_2(%arg0: i32, %arg1: i32) -> (i32, i32, i32) {
    %c0_i32 = arith.constant 0 : i32
    %c0_i32_0 = arith.constant 0 : i32
    return %arg0, %arg1, %c0_i32 : i32, i32, i32
  }
}

</mosaic_0001>

<llo_original>
// kernel: tpu_custom_call.1
$region0: #{tpu_custom_call.1}
  #allocation0 [shape = 'u32[]', space=smem, size = 0x4, offset = 0x4, fixed_abs, tag = 'smem constant byte address 0x4 - core index']
  #allocation1 [shape = 'u32[72,128]{1,0:T(1,128)}', space=vmem, size = 0x9000, scoped, tag = 'internal scratch']
  %s0 = inlined_call_operand.vmem [shape: f32[8,2,32], index: 0, kind: input, shape index: {}]
  %s1 = inlined_call_operand.vmem [shape: f32[64,1,32], index: 1, kind: input, shape index: {}]
  %s2 = inlined_call_operand.hbm [shape: f32[8,2,32], index: 2, kind: output, shape index: {}]
  %s3 = sld [smem:[#allocation0]]
  $region18: #{tpu_custom_call.1} parent=0
    _
  %s5 = ssub.s32 1, %s3
  %s6 = scalar_select 0, %s5, %s3
  $region1: #{tpu_custom_call.1} parent=0
    #allocation2 [shape = 'u8[8192]{0}', space=vmem, size = 0x2000, scoped, tag = 'output window, operand 0, single buffered']
    #allocation3 [shape = 's32[1]{0}', space=sflag, size = 0x4, scoped, tag = 'scoped memory for tpu_custom_call.1']
    %7 = vsyncpa [#allocation3], 0
    // Predicated region
    $region2: #{tpu_custom_call.1} parent=1 // pred_check
      _
    $region3: #{tpu_custom_call.1} parent=1 // pred_check_branch
      %9 = sbr.rel (0) target = $region5
    $region4: #{tpu_custom_call.1} parent=1 // pred_region
      _
    $region5: #{tpu_custom_call.1} parent=1 // pred_fallthru
      _
    // Predicated region
    $region6: #{tpu_custom_call.1} parent=1 // pred_check
      _
    $region7: #{tpu_custom_call.1} parent=1 // pred_check_branch
      %11 = sbr.rel (0) target = $region9
    $region8: #{tpu_custom_call.1} parent=1 // pred_region
      _
    $region9: #{tpu_custom_call.1} parent=1 // pred_fallthru
      _
    %v12 = vld [vmem:[%s0] sm:$0x3]
    %v13 = vld [vmem:[%s0 + $0x2] sm:$0x3]
    %v14 = vld [vmem:[%s0 + $0x4] sm:$0x3]
    %v15 = vld [vmem:[%s0 + $0x6] sm:$0x3]
    %v16 = vld [vmem:[%s0 + $0x8] sm:$0x3]
    %v17 = vld [vmem:[%s0 + $0xa] sm:$0x3]
    %v18 = vld [vmem:[%s0 + $0xc] sm:$0x3]
    %v19 = vld [vmem:[%s0 + $0xe] sm:$0x3]
    %v20 = vld [vmem:[%s1] sm:$0x1]
    %v21 = vld [vmem:[%s1 + $0x1] sm:$0x1]
    %v22 = vld [vmem:[%s1 + $0x2] sm:$0x1]
    %v23 = vld [vmem:[%s1 + $0x3] sm:$0x1]
    %v24 = vld [vmem:[%s1 + $0x4] sm:$0x1]
    %v25 = vld [vmem:[%s1 + $0x5] sm:$0x1]
    %v26 = vld [vmem:[%s1 + $0x6] sm:$0x1]
    %v27 = vld [vmem:[%s1 + $0x7] sm:$0x1]
    %v36 = vperm.slane %v20, 0
    %v37 = vperm.slane %v21, 0
    %v38 = vperm.slane %v22, 0
    %v39 = vperm.slane %v23, 0
    %v40 = vperm.slane %v24, 0
    %v41 = vperm.slane %v25, 0
    %v42 = vperm.slane %v26, 0
    %v43 = vperm.slane %v27, 0
    %v52 = vadd.f32 %v12, %v36
    %v53 = vadd.f32 %v13, %v37
    %v54 = vadd.f32 %v14, %v38
    %v55 = vadd.f32 %v15, %v39
    %v56 = vadd.f32 %v16, %v40
    %v57 = vadd.f32 %v17, %v41
    %v58 = vadd.f32 %v18, %v42
    %v59 = vadd.f32 %v19, %v43
    %vm60 = vcmask 254976
    %61 = vst.msk [vmem:[#allocation2] sm:$0x3] %vm60, %v52
    %62 = vst.msk [vmem:[#allocation2 + $0x2] sm:$0x3] %vm60, %v53
    %63 = vst.msk [vmem:[#allocation2 + $0x4] sm:$0x3] %vm60, %v54
    %64 = vst.msk [vmem:[#allocation2 + $0x6] sm:$0x3] %vm60, %v55
    %65 = vst.msk [vmem:[#allocation2 + $0x8] sm:$0x3] %vm60, %v56
    %66 = vst.msk [vmem:[#allocation2 + $0xa] sm:$0x3] %vm60, %v57
    %67 = vst.msk [vmem:[#allocation2 + $0xc] sm:$0x3] %vm60, %v58
    %68 = vst.msk [vmem:[#allocation2 + $0xe] sm:$0x3] %vm60, %v59
    // Predicated region
    $region10: #{tpu_custom_call.1} parent=1 // pred_check
      _
    $region11: #{tpu_custom_call.1} parent=1 // pred_check_branch
      %70 = sbr.rel (0) target = $region13
    $region12: #{tpu_custom_call.1} parent=1 // pred_region
      %72 = vsyncadd [#allocation3], 0
      %s73 = sshll.u32 [#allocation2], 4
      %s74 = int_to_ptr.vmem [resolvable:$true] %s73
      %s75 = sshll.u32 %s2, 4
      %s76 = int_to_ptr.hbm [resolvable:$true] %s75
      %81 = dma.vmem_to_hbm [thread:$0]  %s74, 256, %s76, [#allocation3], 32, 32, 2
    $region13: #{tpu_custom_call.1} parent=1 // pred_fallthru
      _
    // Predicated region
    $region14: #{tpu_custom_call.1} parent=1 // pred_check
      _
    $region15: #{tpu_custom_call.1} parent=1 // pred_check_branch
      %83 = sbr.rel (0) target = $region17
    $region16: #{tpu_custom_call.1} parent=1 // pred_region
      %85 = dma.done [#allocation3], 256
    $region17: #{tpu_custom_call.1} parent=1 // pred_fallthru
      _
    %86 = vsyncpa [#allocation3], 1

</llo_original>
